<compile_context>
chip_gen: v7x
topology: tpu7x:2x2x1
jax: 0.10.0
libtpu: 0.0.40
codegen_flags: <defaults>
</compile_context>

<pallas_src>
import math
import functools

import jax
import jax.numpy as jnp
from jax import lax
from jax.experimental import pallas as pl
from jax.experimental.pallas import tpu as pltpu


# ---------------------------------------------------------------------------
# parameter / buffer setup (glue, plain JAX)
# ---------------------------------------------------------------------------
def make_positional_encoding_table(d_model, max_len=5000, dtype=jnp.float32):
    """Deterministic `pe` buffer, shape [max_len, d_model] (the PyTorch buffer
    is [max_len, 1, d_model]; the singleton batch axis is handled by the
    broadcast in the wrapper)."""
    position = jnp.arange(max_len, dtype=jnp.float32)[:, None]           # [L,1]
    div_term = jnp.exp(
        jnp.arange(0, d_model, 2, dtype=jnp.float32) * (-math.log(10000.0) / d_model)
    )                                                                    # [D/2]
    angles = position * div_term                                         # [L,D/2]
    pe = jnp.zeros((max_len, d_model), dtype=jnp.float32)
    pe = pe.at[:, 0::2].set(jnp.sin(angles))
    pe = pe.at[:, 1::2].set(jnp.cos(angles))
    return pe.astype(dtype)


# ---------------------------------------------------------------------------
# Pallas kernels (hot path: lane-dense elementwise add + dropout)
# ---------------------------------------------------------------------------
def _pe_add_kernel(x_ref, pe_ref, o_ref):
    # x_ref, pe_ref, o_ref: [TS, B*D] lane-dense tiles.
    o_ref[...] = (x_ref[...] + pe_ref[...]).astype(o_ref.dtype)


def _hash_u32(idx_i32, seed_i32):
    """murmur3-style finalizer over (element index, seed) -> uniform uint32.
    Pure 32-bit integer VPU ops: lowers on TPU and in interpret mode."""
    h = idx_i32.astype(jnp.uint32) + seed_i32.astype(jnp.uint32) * jnp.uint32(0x9E3779B9)
    h = h ^ (h >> 16)
    h = h * jnp.uint32(0x85EBCA6B)
    h = h ^ (h >> 13)
    h = h * jnp.uint32(0xC2B2AE35)
    h = h ^ (h >> 16)
    return h


def _pe_add_dropout_kernel(seed_ref, x_ref, pe_ref, o_ref, *, p, seq_tile):
    # Training-mode dropout: keep with prob (1-p), scale survivors by 1/(1-p).
    ts, cols = x_ref.shape
    y = x_ref[...] + pe_ref[...]

    # Global per-element counter (independent of tiling) -> decorrelated mask
    # across grid steps even though the same scalar seed is used everywhere.
    row0 = pl.program_id(0) * seq_tile
    row = lax.broadcasted_iota(jnp.int32, (ts, cols), 0) + row0
    col = lax.broadcasted_iota(jnp.int32, (ts, cols), 1)
    idx = row * cols + col

    bits = _hash_u32(idx, seed_ref[0])
    threshold = jnp.uint32(int((1.0 - p) * 4294967296.0))   # P(keep) = 1-p
    keep = bits < threshold

    scale = jnp.asarray(1.0 / (1.0 - p), dtype=y.dtype)
    o_ref[...] = jnp.where(keep, y * scale, jnp.zeros_like(y)).astype(o_ref.dtype)


# ---------------------------------------------------------------------------
# wrapper
# ---------------------------------------------------------------------------
def _choose_seq_tile(S, cols, itemsize, target_bytes=2 << 20):
    """Largest seq tile with ~target_bytes per stream: with double-buffered
    x/pe/out tiles that is ~6*target (<32 MiB default scoped VMEM, incl v7x)."""
    per_row = max(1, cols * itemsize)
    rows = max(1, target_bytes // per_row)
    if rows >= S:
        return int(S)
    return int(max(8, (rows // 8) * 8))


def positional_encoding_forward(x, pe, *, dropout_p=0.1, training=False, seed=0):
    """x: [seq_len, batch, d_model]; pe: [max_len, d_model]."""
    S, B, D = x.shape
    pe_s = pe[:S]
    if pe_s.dtype != x.dtype:
        pe_s = pe_s.astype(x.dtype)

    # Lane-dense 2D presentation: [S, B*D].  The reshape of x is free
    # (row-major contiguous); pe is broadcast over batch once in the wrapper.
    cols = B * D
    x2 = x.reshape(S, cols)
    pe2 = jnp.tile(pe_s, (1, B))            # [S, B*D]; column c -> pe[s, c % D]

    TS = _choose_seq_tile(S, cols, x.dtype.itemsize)
    grid = (pl.cdiv(S, TS),)

    tile_spec = pl.BlockSpec((TS, cols), lambda i: (i, 0))
    cparams = pltpu.CompilerParams(dimension_semantics=("parallel",))

    if (not training) or float(dropout_p) == 0.0:
        # nn.Dropout is identity in eval mode.
        out2 = pl.pallas_call(
            _pe_add_kernel,
            grid=grid,
            out_shape=jax.ShapeDtypeStruct((S, cols), x.dtype),
            in_specs=[tile_spec, tile_spec],
            out_specs=tile_spec,
            compiler_params=cparams,
        )(x2, pe2)
    else:
        seed_arr = jnp.asarray([seed], dtype=jnp.int32)
        kernel = functools.partial(
            _pe_add_dropout_kernel, p=float(dropout_p), seq_tile=TS
        )
        out2 = pl.pallas_call(
            kernel,
            grid=grid,
            out_shape=jax.ShapeDtypeStruct((S, cols), x.dtype),
            in_specs=[
                pl.BlockSpec(memory_space=pltpu.MemorySpace.SMEM),  # seed scalar
                tile_spec,
                tile_spec,
            ],
            out_specs=tile_spec,
            compiler_params=cparams,
        )(seed_arr, x2, pe2)

    return out2.reshape(S, B, D)


# ---------------------------------------------------------------------------
# demo / self-check
# ---------------------------------------------------------------------------
if __name__ == "__main__":
    d_model = 32
    seq_len = 8
    batch = 2
    max_len = 64  # small max_len; forward only uses pe[:seq_len]

    key = jax.random.PRNGKey(0)
    x = jax.random.normal(key, (seq_len, batch, d_model), dtype=jnp.float32)

    pe = make_positional_encoding_table(d_model, max_len=max_len)

    # --- eval-mode forward (dropout is identity) ---
    out_eval = positional_encoding_forward(x, pe, dropout_p=0.1, training=False)
    out_eval = jax.block_until_ready(out_eval)

    ref = x + pe[:seq_len][:, None, :]
    assert out_eval.shape == (seq_len, batch, d_model)
    assert jnp.allclose(out_eval, ref, atol=1e-6), "mismatch vs reference add"

    # --- training-mode forward (in-kernel hash-PRNG dropout) ---
    p = 0.1
    out_train = positional_encoding_forward(
        x, pe, dropout_p=p, training=True, seed=1234
    )
    out_train = jax.block_until_ready(out_train)
    assert out_train.shape == (seq_len, batch, d_model)
    # dropped elements are exactly zero, kept elements are ref / (1-p)
    kept = out_train != 0.0
    n_kept = int(jnp.sum(kept))
    assert 0 < n_kept <= out_train.size
    assert jnp.allclose(
        jnp.where(kept, out_train, ref / (1.0 - p)), ref / (1.0 - p), atol=1e-5
    ), "dropout scaling mismatch"

    print("KERNEL_OK")
</pallas_src>

<mosaic_0001>
module attributes {stable_mosaic.version = 11 : i64} {
  func.func @_pe_add_kernel(%arg0: i32, %arg1: memref<8x64xf32, #tpu.memory_space<vmem>>, %arg2: memref<8x64xf32, #tpu.memory_space<vmem>>, %arg3: memref<8x64xf32, #tpu.memory_space<vmem>>) attributes {dimension_semantics = [#tpu.dimension_semantics<parallel>], iteration_bounds = array<i64: 1>, scalar_prefetch = 0 : i64, scratch_operands = 0 : i64, tpu.core_type = #tpu.core_type<tc>, window_params = [{transform_indices = @transform_0, window_bounds = array<i64: 8, 64>}, {transform_indices = @transform_1, window_bounds = array<i64: 8, 64>}, {transform_indices = @transform_2, window_bounds = array<i64: 8, 64>}]} {
    %c0 = arith.constant 0 : index
    %c0_0 = arith.constant 0 : index
    %0 = vector.load %arg1[%c0, %c0_0] : memref<8x64xf32, #tpu.memory_space<vmem>>, vector<8x64xf32>
    %c0_1 = arith.constant 0 : index
    %c0_2 = arith.constant 0 : index
    %1 = vector.load %arg2[%c0_1, %c0_2] : memref<8x64xf32, #tpu.memory_space<vmem>>, vector<8x64xf32>
    %2 = arith.addf %0, %1 : vector<8x64xf32>
    %c0_3 = arith.constant 0 : index
    %c0_4 = arith.constant 0 : index
    %3 = vector.load %arg3[%c0_3, %c0_4] : memref<8x64xf32, #tpu.memory_space<vmem>>, vector<8x64xf32>
    tpu.vector_store %arg3[%c0_3, %c0_4], %2 {strides = array<i32>} : memref<8x64xf32, #tpu.memory_space<vmem>>, vector<8x64xf32>,
    return
  }
  func.func @transform_0(%arg0: i32) -> (i32, i32) {
    %c0_i32 = arith.constant 0 : i32
    %c0_i32_0 = arith.constant 0 : i32
    return %arg0, %c0_i32 : i32, i32
  }
  func.func @transform_1(%arg0: i32) -> (i32, i32) {
    %c0_i32 = arith.constant 0 : i32
    %c0_i32_0 = arith.constant 0 : i32
    return %arg0, %c0_i32 : i32, i32
  }
  func.func @transform_2(%arg0: i32) -> (i32, i32) {
    %c0_i32 = arith.constant 0 : i32
    %c0_i32_0 = arith.constant 0 : i32
    return %arg0, %c0_i32 : i32, i32
  }
}

</mosaic_0001>

<llo_original>
// kernel: tpu_custom_call.1
$region0: #{tpu_custom_call.1}
  #allocation0 [shape = 'u32[]', space=smem, size = 0x4, offset = 0x4, fixed_abs, tag = 'smem constant byte address 0x4 - core index']
  #allocation1 [shape = 'u32[144,128]{1,0:T(1,128)}', space=vmem, size = 0x12000, scoped, tag = 'internal scratch']
  %s0 = inlined_call_operand.hbm [shape: f32[8,64], index: 0, kind: input, shape index: {}]
  %s1 = inlined_call_operand.hbm [shape: f32[8,64], index: 1, kind: input, shape index: {}]
  %s2 = inlined_call_operand.hbm [shape: f32[8,64], index: 2, kind: output, shape index: {}]
  %s3 = sld [smem:[#allocation0]]
  $region26: #{tpu_custom_call.1} parent=0
    _
  %s5 = ssub.s32 1, %s3
  %s6 = scalar_select 0, %s5, %s3
  $region1: #{tpu_custom_call.1} parent=0
    #allocation2 [shape = 'u8[4096]{0}', space=vmem, size = 0x1000, scoped, tag = 'input window, operand 0, single buffered']
    #allocation3 [shape = 's32[1]{0}', space=sflag, size = 0x4, scoped, tag = 'scoped memory for tpu_custom_call.1']
    #allocation4 [shape = 's32[1]{0}', space=sflag, size = 0x4, scoped, tag = 'scoped memory for tpu_custom_call.1']
    #allocation5 [shape = 'u8[4096]{0}', space=vmem, size = 0x1000, scoped, tag = 'input window, operand 1, single buffered']
    #allocation6 [shape = 's32[1]{0}', space=sflag, size = 0x4, scoped, tag = 'scoped memory for tpu_custom_call.1']
    #allocation7 [shape = 'u8[4096]{0}', space=vmem, size = 0x1000, scoped, tag = 'output window, operand 0, single buffered']
    %7 = vsyncpa [#allocation3], 0
    %8 = vsyncpa [#allocation6], 0
    %9 = vsyncpa [#allocation4], 0
    // Predicated region
    $region2: #{tpu_custom_call.1} parent=1 // pred_check
      _
    $region3: #{tpu_custom_call.1} parent=1 // pred_check_branch
      %11 = sbr.rel (0) target = $region5
    $region4: #{tpu_custom_call.1} parent=1 // pred_region
      %s13 = ssub.s32 128, 128
      %14 = vsyncadd [#allocation3], %s13
      %s16 = sshll.u32 [#allocation2], 4
      %s17 = int_to_ptr.vmem [resolvable:$true] %s16
      %19 = dma.hbm_to_vmem [thread:$0]  %s0, 128, %s17, [#allocation3]
    $region5: #{tpu_custom_call.1} parent=1 // pred_fallthru
      _
    // Predicated region
    $region6: #{tpu_custom_call.1} parent=1 // pred_check
      _
    $region7: #{tpu_custom_call.1} parent=1 // pred_check_branch
      %21 = sbr.rel (0) target = $region9
    $region8: #{tpu_custom_call.1} parent=1 // pred_region
      %s23 = ssub.s32 128, 128
      %24 = vsyncadd [#allocation6], %s23
      %s26 = sshll.u32 [#allocation5], 4
      %s27 = int_to_ptr.vmem [resolvable:$true] %s26
      %29 = dma.hbm_to_vmem [thread:$0]  %s1, 128, %s27, [#allocation6]
    $region9: #{tpu_custom_call.1} parent=1 // pred_fallthru
      _
    // Predicated region
    $region10: #{tpu_custom_call.1} parent=1 // pred_check
      _
    $region11: #{tpu_custom_call.1} parent=1 // pred_check_branch
      %31 = sbr.rel (0) target = $region13
    $region12: #{tpu_custom_call.1} parent=1 // pred_region
      %32 = dma.done [#allocation3], 128
    $region13: #{tpu_custom_call.1} parent=1 // pred_fallthru
      _
    // Predicated region
    $region14: #{tpu_custom_call.1} parent=1 // pred_check
      _
    $region15: #{tpu_custom_call.1} parent=1 // pred_check_branch
      %34 = sbr.rel (0) target = $region17
    $region16: #{tpu_custom_call.1} parent=1 // pred_region
      %35 = dma.done [#allocation6], 128
    $region17: #{tpu_custom_call.1} parent=1 // pred_fallthru
      _
    %v36 = vld [vmem:[#allocation2] sm:$0xff]
    %v37 = vld [vmem:[#allocation5] sm:$0xff]
    %v38 = vadd.f32 %v36, %v37
    %vm39 = vcmask 523264
    %40 = vst.msk [vmem:[#allocation7] sm:$0xff] %vm39, %v38
    // Predicated region
    $region18: #{tpu_custom_call.1} parent=1 // pred_check
      _
    $region19: #{tpu_custom_call.1} parent=1 // pred_check_branch
      %42 = sbr.rel (0) target = $region21
    $region20: #{tpu_custom_call.1} parent=1 // pred_region
      %s44 = ssub.s32 128, 128
      %45 = vsyncadd [#allocation4], %s44
      %s47 = sshll.u32 [#allocation7], 4
      %s48 = int_to_ptr.vmem [resolvable:$true] %s47
      %50 = dma.vmem_to_hbm [thread:$0]  %s48, 128, %s2, [#allocation4]
    $region21: #{tpu_custom_call.1} parent=1 // pred_fallthru
      _
    // Predicated region
    $region22: #{tpu_custom_call.1} parent=1 // pred_check
      _
    $region23: #{tpu_custom_call.1} parent=1 // pred_check_branch
      %52 = sbr.rel (0) target = $region25
    $region24: #{tpu_custom_call.1} parent=1 // pred_region
      %53 = dma.done [#allocation4], 128
    $region25: #{tpu_custom_call.1} parent=1 // pred_fallthru
      _
    %54 = vsyncpa [#allocation3], 1
    %55 = vsyncpa [#allocation6], 1
    %56 = vsyncpa [#allocation4], 1

</llo_original>
